<compile_context>
chip_gen: v6e
topology: v6e:2x2x1
jax: 0.10.0
libtpu: 0.0.40
codegen_flags: <defaults>
</compile_context>

<pallas_src>
import jax
import jax.numpy as jnp
from jax.experimental import pallas as pl
from jax.experimental.pallas import tpu as pltpu


def _vocab_proj_kernel(x_ref, w_ref, b_ref, o_ref, acc_ref):
    # x_ref  : (TM, TK)  activation tile
    # w_ref  : (TK, V)   weight tile, already (d_model, vocab) layout
    # b_ref  : (1,  V)   bias
    # o_ref  : (TM, V)   log-prob output tile (resident across the K axis)
    # acc_ref: (TM, V)   f32 accumulator scratch
    k = pl.program_id(1)

    @pl.when(k == 0)
    def _():
        acc_ref[...] = jnp.zeros_like(acc_ref)

    acc_ref[...] += jnp.dot(
        x_ref[...], w_ref[...], preferred_element_type=jnp.float32
    )

    @pl.when(k == pl.num_programs(1) - 1)
    def _():
        logits = acc_ref[...] + b_ref[...].astype(jnp.float32)
        m = jnp.max(logits, axis=-1, keepdims=True)           # XLU
        z = logits - m
        lse = jnp.log(jnp.sum(jnp.exp(z), axis=-1, keepdims=True))  # EUP + XLU
        o_ref[...] = (z - lse).astype(o_ref.dtype)


def vocab_projection_forward(x: jnp.ndarray,
                             weight: jnp.ndarray,
                             bias: jnp.ndarray) -> jnp.ndarray:
    """x: (..., d_model); weight: (vocab_size, d_model) [torch Linear layout];
    bias: (vocab_size,).  Returns log_softmax(x @ weight.T + bias, axis=-1)."""
    *lead, D = x.shape
    V = weight.shape[0]

    # --- flatten leading dims to a single lane-dense row axis -------------
    M = 1
    for s in lead:
        M *= s
    x2 = x.reshape(M, D)

    # Pad rows to a sublane multiple (8); padded rows are harmless garbage
    # (log_softmax of the bias) and are sliced off at the end.
    M_pad = ((M + 7) // 8) * 8
    if M_pad != M:
        x2 = jnp.pad(x2, ((0, M_pad - M), (0, 0)))

    # Row tile: largest power-of-two divisor of M_pad (amortizes the
    # ~0.35us per-grid-step overhead, many parallel steps for megacore).
    tm = 8
    for cand in (512, 256, 128, 64, 32, 16, 8):
        if M_pad % cand == 0:
            tm = cand
            break

    # Reduction tile over d_model: full D when small, else a 128-multiple.
    tk = D
    if D > 1024:
        for cand in (1024, 512, 256, 128):
            if D % cand == 0:
                tk = cand
                break

    w_t = weight.T              # (D, V) — MXU-friendly layout (glue, one-time)
    b2 = bias.reshape(1, V)

    grid = (M_pad // tm, D // tk)

    # VMEM budget estimate: double-buffered x/w/out + bias + f32 accumulator.
    itm = jnp.dtype(x.dtype).itemsize
    est = (2 * tm * tk * itm + 2 * tk * V * itm + 2 * V * itm
           + 2 * tm * V * itm + tm * V * 4)
    vmem_limit = None
    if est > 16 * 1024 * 1024:                     # conservative v5e default
        vmem_limit = min(int(est * 3 // 2), 48 * 1024 * 1024)  # < v7x 64 MiB

    out2 = pl.pallas_call(
        _vocab_proj_kernel,
        out_shape=jax.ShapeDtypeStruct((M_pad, V), x.dtype),
        grid_spec=pltpu.PrefetchScalarGridSpec(
            num_scalar_prefetch=0,
            grid=grid,
            in_specs=[
                pl.BlockSpec((tm, tk), lambda i, k: (i, k)),   # x
                pl.BlockSpec((tk, V), lambda i, k: (k, 0)),    # W^T
                pl.BlockSpec((1, V), lambda i, k: (0, 0)),     # bias (constant)
            ],
            out_specs=pl.BlockSpec((tm, V), lambda i, k: (i, 0)),
            scratch_shapes=[pltpu.VMEM((tm, V), jnp.float32)],
        ),
        compiler_params=pltpu.CompilerParams(
            dimension_semantics=("parallel", "arbitrary"),
            vmem_limit_bytes=vmem_limit,
        ),
    )(x2, w_t, b2)

    out2 = out2[:M]
    return out2.reshape(*lead, V)


if __name__ == "__main__":
    # Small shapes consistent with the module: batch=2, seq=8, d_model=32,
    # vocab_size=256 (multiple of 128 -> lane-dense output tiles).
    batch, seq, d_model, vocab_size = 2, 8, 32, 256

    key = jax.random.PRNGKey(0)
    kx, kw, kb = jax.random.split(key, 3)
    x = jax.random.normal(kx, (batch, seq, d_model), dtype=jnp.float32)
    weight = jax.random.normal(kw, (vocab_size, d_model), dtype=jnp.float32)
    weight = weight * (1.0 / jnp.sqrt(d_model))
    bias = jax.random.normal(kb, (vocab_size,), dtype=jnp.float32) * 0.1

    y = vocab_projection_forward(x, weight, bias)
    y = jax.block_until_ready(y)

    # Plain-JAX reference.
    y_ref = jax.nn.log_softmax(x @ weight.T + bias, axis=-1)
    assert y.shape == (batch, seq, vocab_size)
    assert jnp.allclose(y, y_ref, atol=2e-5, rtol=2e-5), "mismatch vs reference"
    # Sanity: rows are valid log-probs (logsumexp == 0).
    assert jnp.allclose(jax.scipy.special.logsumexp(y, axis=-1), 0.0, atol=1e-4)

    print("KERNEL_OK")
</pallas_src>

<mosaic_0001>
module attributes {stable_mosaic.version = 11 : i64} {
  func.func @_vocab_proj_kernel(%arg0: i32, %arg1: i32, %arg2: memref<16x32xf32, #tpu.memory_space<vmem>>, %arg3: memref<32x256xf32, #tpu.memory_space<vmem>>, %arg4: memref<1x256xf32, #tpu.memory_space<vmem>>, %arg5: memref<16x256xf32, #tpu.memory_space<vmem>>, %arg6: memref<16x256xf32, #tpu.memory_space<vmem>>) attributes {dimension_semantics = [#tpu.dimension_semantics<parallel>, #tpu.dimension_semantics<arbitrary>], iteration_bounds = array<i64: 1, 1>, scalar_prefetch = 0 : i64, scratch_operands = 1 : i64, tpu.core_type = #tpu.core_type<tc>, window_params = [{transform_indices = @transform_0, window_bounds = array<i64: 16, 32>}, {transform_indices = @transform_1, window_bounds = array<i64: 32, 256>}, {pipeline_mode = #tpu.pipeline_mode<synchronous>, transform_indices = @transform_2, window_bounds = array<i64: 1, 256>}, {transform_indices = @transform_3, window_bounds = array<i64: 16, 256>}]} {
    %c0_i32 = arith.constant 0 : i32
    %0 = arith.cmpi eq, %arg1, %c0_i32 : i32
    %1 = arith.extui %0 : i1 to i32
    %c0_i32_0 = arith.constant 0 : i32
    %2 = arith.cmpi ne, %1, %c0_i32_0 : i32
    scf.if %2 {
      %cst_10 = arith.constant 0.000000e+00 : f32
      %12 = vector.broadcast %cst_10 : f32 to vector<16x256xf32>
      %c0_11 = arith.constant 0 : index
      %c0_12 = arith.constant 0 : index
      %13 = vector.load %arg6[%c0_11, %c0_12] : memref<16x256xf32, #tpu.memory_space<vmem>>, vector<16x256xf32>
      tpu.vector_store %arg6[%c0_11, %c0_12], %12 {strides = array<i32>} : memref<16x256xf32, #tpu.memory_space<vmem>>, vector<16x256xf32>,
    } else {
    }
    %c0 = arith.constant 0 : index
    %c0_1 = arith.constant 0 : index
    %3 = vector.load %arg6[%c0, %c0_1] : memref<16x256xf32, #tpu.memory_space<vmem>>, vector<16x256xf32>
    %c0_2 = arith.constant 0 : index
    %c0_3 = arith.constant 0 : index
    %4 = vector.load %arg2[%c0_2, %c0_3] : memref<16x32xf32, #tpu.memory_space<vmem>>, vector<16x32xf32>
    %c0_4 = arith.constant 0 : index
    %c0_5 = arith.constant 0 : index
    %5 = vector.load %arg3[%c0_4, %c0_5] : memref<32x256xf32, #tpu.memory_space<vmem>>, vector<32x256xf32>
    %cst = arith.constant dense<0.000000e+00> : vector<16x256xf32>
    %6 = tpu.matmul %4, %5, %cst {dimension_numbers = #tpu.dot_dimension_numbers<[1], [0], [0], [1], [0, 0, 1, 1], [], []>} : vector<16x32xf32>, vector<32x256xf32>, vector<16x256xf32> -> vector<16x256xf32>
    %7 = arith.addf %3, %6 : vector<16x256xf32>
    %c0_6 = arith.constant 0 : index
    %c0_7 = arith.constant 0 : index
    %8 = vector.load %arg6[%c0_6, %c0_7] : memref<16x256xf32, #tpu.memory_space<vmem>>, vector<16x256xf32>
    tpu.vector_store %arg6[%c0_6, %c0_7], %7 {strides = array<i32>} : memref<16x256xf32, #tpu.memory_space<vmem>>, vector<16x256xf32>,
    %c0_i32_8 = arith.constant 0 : i32
    %9 = arith.cmpi eq, %arg1, %c0_i32_8 : i32
    %10 = arith.extui %9 : i1 to i32
    %c0_i32_9 = arith.constant 0 : i32
    %11 = arith.cmpi ne, %10, %c0_i32_9 : i32
    scf.if %11 {
      %c0_10 = arith.constant 0 : index
      %c0_11 = arith.constant 0 : index
      %12 = vector.load %arg6[%c0_10, %c0_11] : memref<16x256xf32, #tpu.memory_space<vmem>>, vector<16x256xf32>
      %c0_12 = arith.constant 0 : index
      %c0_13 = arith.constant 0 : index
      %13 = vector.load %arg4[%c0_12, %c0_13] : memref<1x256xf32, #tpu.memory_space<vmem>>, vector<1x256xf32>
      %14 = vector.broadcast %13 : vector<1x256xf32> to vector<16x256xf32>
      %15 = arith.addf %12, %14 : vector<16x256xf32>
      %cst_14 = arith.constant dense<0xFF800000> : vector<16xf32>
      %16 = vector.multi_reduction <maximumf>, %15, %cst_14 [1] : vector<16x256xf32> to vector<16xf32>
      %17 = vector.shape_cast %16 : vector<16xf32> to vector<16x1xf32>
      %18 = vector.broadcast %17 : vector<16x1xf32> to vector<16x256xf32>
      %19 = arith.subf %15, %18 : vector<16x256xf32>
      %20 = math.exp %19 : vector<16x256xf32>
      %cst_15 = arith.constant dense<0.000000e+00> : vector<16xf32>
      %21 = vector.multi_reduction <add>, %20, %cst_15 [1] : vector<16x256xf32> to vector<16xf32>
      %22 = vector.shape_cast %21 : vector<16xf32> to vector<16x1xf32>
      %23 = math.log %22 : vector<16x1xf32>
      %24 = vector.broadcast %23 : vector<16x1xf32> to vector<16x256xf32>
      %25 = arith.subf %19, %24 : vector<16x256xf32>
      %c0_16 = arith.constant 0 : index
      %c0_17 = arith.constant 0 : index
      %26 = vector.load %arg5[%c0_16, %c0_17] : memref<16x256xf32, #tpu.memory_space<vmem>>, vector<16x256xf32>
      tpu.vector_store %arg5[%c0_16, %c0_17], %25 {strides = array<i32>} : memref<16x256xf32, #tpu.memory_space<vmem>>, vector<16x256xf32>,
    } else {
    }
    return
  }
  func.func @transform_0(%arg0: i32, %arg1: i32) -> (i32, i32) {
    %c0_i32 = arith.constant 0 : i32
    return %arg0, %arg1 : i32, i32
  }
  func.func @transform_1(%arg0: i32, %arg1: i32) -> (i32, i32) {
    %c0_i32 = arith.constant 0 : i32
    %c0_i32_0 = arith.constant 0 : i32
    return %arg1, %c0_i32 : i32, i32
  }
  func.func @transform_2(%arg0: i32, %arg1: i32) -> (i32, i32) {
    %c0_i32 = arith.constant 0 : i32
    %c0_i32_0 = arith.constant 0 : i32
    %c0_i32_1 = arith.constant 0 : i32
    return %c0_i32, %c0_i32_0 : i32, i32
  }
  func.func @transform_3(%arg0: i32, %arg1: i32) -> (i32, i32) {
    %c0_i32 = arith.constant 0 : i32
    %c0_i32_0 = arith.constant 0 : i32
    return %arg0, %c0_i32 : i32, i32
  }
}

</mosaic_0001>

<llo_original>
// kernel: tpu_custom_call.1
$region0: #{tpu_custom_call.1}
  #allocation0 [shape = 'u32[]', space=smem, size = 0x4, offset = 0x4, fixed_abs, tag = 'smem constant byte address 0x4 - core index']
  #allocation1 [shape = 'u32[144,128]{1,0:T(1,128)}', space=vmem, size = 0x12000, scoped, tag = 'internal scratch']
  #allocation2 [shape = 'f32[16,256]{1,0:T(8,128)}', space=vmem, size = 0x4000, scoped, tag = 'scratch operand']
  %s0 = inlined_call_operand.hbm [shape: f32[16,32], index: 0, kind: input, shape index: {}]
  %s1 = inlined_call_operand.hbm [shape: f32[32,256], index: 1, kind: input, shape index: {}]
  %s2 = inlined_call_operand.vmem [shape: f32[1,256], index: 2, kind: input, shape index: {}]
  %s3 = inlined_call_operand.hbm [shape: f32[16,256], index: 3, kind: output, shape index: {}]
  %s4 = sld [smem:[#allocation0]]
  $region38: #{tpu_custom_call.1} parent=0
    _
  %s6 = ssub.s32 1, %s4
  %s7 = scalar_select 0, %s6, %s4
  $region1: #{tpu_custom_call.1} parent=0
    #allocation3 [shape = 'u8[8192]{0}', space=vmem, size = 0x2000, scoped, tag = 'input window, operand 0, single buffered']
    #allocation4 [shape = 's32[1]{0}', space=sflag, size = 0x4, scoped, tag = 'scoped memory for tpu_custom_call.1']
    #allocation5 [shape = 's32[1]{0}', space=sflag, size = 0x4, scoped, tag = 'scoped memory for tpu_custom_call.1']
    #allocation6 [shape = 'u8[32768]{0}', space=vmem, size = 0x8000, scoped, tag = 'input window, operand 1, single buffered']
    #allocation7 [shape = 's32[1]{0}', space=sflag, size = 0x4, scoped, tag = 'scoped memory for tpu_custom_call.1']
    #allocation8 [shape = 'u8[16384]{0}', space=vmem, size = 0x4000, scoped, tag = 'output window, operand 0, single buffered']
    %8 = vsyncpa [#allocation4], 0
    %9 = vsyncpa [#allocation7], 0
    %10 = vsyncpa [#allocation5], 0
    // Predicated region
    $region2: #{tpu_custom_call.1} parent=1 // pred_check
      _
    $region3: #{tpu_custom_call.1} parent=1 // pred_check_branch
      %12 = sbr.rel (0) target = $region5
    $region4: #{tpu_custom_call.1} parent=1 // pred_region
      %s14 = ssub.s32 256, 256
      %15 = vsyncadd [#allocation4], %s14
      %s16 = sshll.u32 [#allocation3], 4
      %s17 = int_to_ptr.vmem [resolvable:$true] %s16
      %22 = dma.hbm_to_vmem [thread:$0]  %s0, 256, %s17, [#allocation4], 128, 128, 8
    $region5: #{tpu_custom_call.1} parent=1 // pred_fallthru
      _
    // Predicated region
    $region6: #{tpu_custom_call.1} parent=1 // pred_check
      _
    $region7: #{tpu_custom_call.1} parent=1 // pred_check_branch
      %24 = sbr.rel (0) target = $region9
    $region8: #{tpu_custom_call.1} parent=1 // pred_region
      %s26 = ssub.s32 1024, 1024
      %27 = vsyncadd [#allocation7], %s26
      %s28 = sshll.u32 [#allocation6], 4
      %s29 = int_to_ptr.vmem [resolvable:$true] %s28
      %34 = dma.hbm_to_vmem [thread:$0]  %s1, 1024, %s29, [#allocation7], 256, 256, 16
    $region9: #{tpu_custom_call.1} parent=1 // pred_fallthru
      _
    // Predicated region
    $region10: #{tpu_custom_call.1} parent=1 // pred_check
      _
    $region11: #{tpu_custom_call.1} parent=1 // pred_check_branch
      %36 = sbr.rel (0) target = $region13
    $region12: #{tpu_custom_call.1} parent=1 // pred_region
      _
    $region13: #{tpu_custom_call.1} parent=1 // pred_fallthru
      _
    // Predicated region
    $region14: #{tpu_custom_call.1} parent=1 // pred_check
      _
    $region15: #{tpu_custom_call.1} parent=1 // pred_check_branch
      %38 = sbr.rel (0) target = $region17
    $region16: #{tpu_custom_call.1} parent=1 // pred_region
      %39 = dma.done [#allocation4], 256
    $region17: #{tpu_custom_call.1} parent=1 // pred_fallthru
      _
    // Predicated region
    $region18: #{tpu_custom_call.1} parent=1 // pred_check
      _
    $region19: #{tpu_custom_call.1} parent=1 // pred_check_branch
      %41 = sbr.rel (0) target = $region21
    $region20: #{tpu_custom_call.1} parent=1 // pred_region
      %42 = dma.done [#allocation7], 1024
    $region21: #{tpu_custom_call.1} parent=1 // pred_fallthru
      _
    %p43 = scmp.eq.s32.totalorder 0, 0
    // Predicated region
    $region22: #{tpu_custom_call.1} parent=1 // pred_check
      %p44 = pneg %p43
    $region23: #{tpu_custom_call.1} parent=1 // pred_check_branch
      %46 = sbr.rel (%p44) target = $region25
    $region24: #{tpu_custom_call.1} parent=1 // pred_region
      %47 = vst [vmem:[#allocation2] sm:$0xff] 0.0
      %48 = vst [vmem:[#allocation2 + $0x8] sm:$0xff] 0.0
      %49 = vst [vmem:[#allocation2 + $0x10] sm:$0xff] 0.0
      %50 = vst [vmem:[#allocation2 + $0x18] sm:$0xff] 0.0
    $region25: #{tpu_custom_call.1} parent=1 // pred_fallthru
      _
    %v51 = vld [vmem:[#allocation2] sm:$0xff]
    %v52 = vld [vmem:[#allocation2 + $0x8] sm:$0xff]
    %v53 = vld [vmem:[#allocation2 + $0x10] sm:$0xff]
    %v54 = vld [vmem:[#allocation2 + $0x18] sm:$0xff]
    %v55 = vld [vmem:[#allocation3] sm:$0xff]
    %v56 = vld [vmem:[#allocation3 + $0x8] sm:$0xff]
    %v57 = vld [vmem:[#allocation6] sm:$0xff]
    %v58 = vld [vmem:[#allocation6 + $0x8] sm:$0xff]
    %v59 = vld [vmem:[#allocation6 + $0x10] sm:$0xff]
    %v60 = vld [vmem:[#allocation6 + $0x18] sm:$0xff]
    %v61 = vld [vmem:[#allocation6 + $0x20] sm:$0xff]
    %v62 = vld [vmem:[#allocation6 + $0x28] sm:$0xff]
    %v63 = vld [vmem:[#allocation6 + $0x30] sm:$0xff]
    %v64 = vld [vmem:[#allocation6 + $0x38] sm:$0xff]
    %vm65 = vcmask 261120
    %v67 = vsel %vm65, %v55, 0
    %v70 = vsel %vm65, %v56, 0
    %72 = vmatprep.subr.mxu0 0.0
    %73 = vmatpush1.msra.mxu0 0.0
    %74 = vmatprep.subr.mxu0 0.0
    %75 = vmatpush1.msra.mxu0 0.0
    %76 = vmatprep.subr.mxu0 0.0
    %77 = vmatpush1.msra.mxu0 0.0
    %78 = vmatprep.subr.mxu0 0.0
    %79 = vmatpush1.msra.mxu0 0.0
    %80 = vmatprep.subr.mxu0 0.0
    %81 = vmatpush1.msra.mxu0 0.0
    %82 = vmatprep.subr.mxu0 0.0
    %83 = vmatpush1.msra.mxu0 0.0
    %84 = vmatprep.subr.mxu0 0.0
    %85 = vmatpush1.msra.mxu0 0.0
    %86 = vmatprep.subr.mxu0 0.0
    %87 = vmatpush1.msra.mxu0 0.0
    %88 = vmatprep.subr.mxu0 0.0
    %89 = vmatpush1.msra.mxu0 0.0
    %90 = vmatprep.subr.mxu0 0.0
    %91 = vmatpush1.msra.mxu0 0.0
    %92 = vmatprep.subr.mxu0 0.0
    %93 = vmatpush1.msra.mxu0 0.0
    %94 = vmatprep.subr.mxu0 0.0
    %95 = vmatpush1.msra.mxu0 0.0
    %96 = vmatprep.subr.mxu0 %v64
    %97 = vmatpush1.msra.mxu0 %v63
    %98 = vmatprep.subr.mxu0 %v62
    %99 = vmatpush1.msra.mxu0 %v61
    %100 = vmatprep.subr.mxu0 %v60
    %101 = vmatpush1.msra.mxu0 %v59
    %102 = vmatprep.subr.mxu0 %v58
    %103 = vmatpush1.msra.mxu0 %v57
    %104 = vmatprep.subr.mxu0 0.0
    %105 = vmatpush2.msra.mxu0 0.0
    %106 = vmatprep.subr.mxu0 0.0
    %107 = vmatpush2.msra.mxu0 0.0
    %108 = vmatprep.subr.mxu0 0.0
    %109 = vmatpush2.msra.mxu0 0.0
    %110 = vmatprep.subr.mxu0 0.0
    %111 = vmatpush2.msra.mxu0 0.0
    %112 = vmatprep.subr.mxu0 0.0
    %113 = vmatpush2.msra.mxu0 0.0
    %114 = vmatprep.subr.mxu0 0.0
    %115 = vmatpush2.msra.mxu0 0.0
    %116 = vmatprep.subr.mxu0 0.0
    %117 = vmatpush2.msra.mxu0 0.0
    %118 = vmatprep.subr.mxu0 0.0
    %119 = vmatpush2.msra.mxu0 0.0
    %120 = vmatprep.subr.mxu0 0.0
    %121 = vmatpush2.msra.mxu0 0.0
    %122 = vmatprep.subr.mxu0 0.0
    %123 = vmatpush2.msra.mxu0 0.0
    %124 = vmatprep.subr.mxu0 0.0
    %125 = vmatpush2.msra.mxu0 0.0
    %126 = vmatprep.subr.mxu0 0.0
    %127 = vmatpush2.msra.mxu0 0.0
    %128 = vmatprep.subr.mxu0 0.0
    %129 = vmatpush2.msra.mxu0 0.0
    %130 = vmatprep.subr.mxu0 0.0
    %131 = vmatpush2.msra.mxu0 0.0
    %132 = vmatprep.subr.mxu0 0.0
    %133 = vmatpush2.msra.mxu0 0.0
    %134 = vmatprep.subr.mxu0 0.0
    %135 = vmatpush2.msra.mxu0 0.0
    %136 = vmatprep.mubr.f32.mxu0 0.0
    %137 = vmatmul.mubr.f32.gmra.mxu0 %v67
    %v138 = vpop.f32.mrf.mxu0
    %v139 = vadd.f32 0.0, %v138
    %v140 = vpop.f32.mrf.mxu0
    %v141 = vadd.f32 0.0, %v140
    %142 = vmatprep.mubr.f32.mxu0 0.0
    %143 = vmatmul.mubr.f32.gmra.mxu0 %v70
    %v144 = vpop.f32.mrf.mxu0
    %v145 = vadd.f32 0.0, %v144
    %v146 = vpop.f32.mrf.mxu0
    %v147 = vadd.f32 0.0, %v146
    %148 = vdwg.mxu0
    %v149 = vadd.f32 %v51, %v139
    %v150 = vadd.f32 %v52, %v141
    %v151 = vadd.f32 %v53, %v145
    %v152 = vadd.f32 %v54, %v147
    %153 = vst [vmem:[#allocation2] sm:$0xff] %v149
    %154 = vst [vmem:[#allocation2 + $0x8] sm:$0xff] %v150
    %155 = vst [vmem:[#allocation2 + $0x10] sm:$0xff] %v151
    %156 = vst [vmem:[#allocation2 + $0x18] sm:$0xff] %v152
    // Predicated region
    $region26: #{tpu_custom_call.1} parent=1 // pred_check
      %p157 = pneg %p43
    $region27: #{tpu_custom_call.1} parent=1 // pred_check_branch
      %159 = sbr.rel (%p157) target = $region29
    $region28: #{tpu_custom_call.1} parent=1 // pred_region
      %v160 = vld [vmem:[#allocation2] sm:$0xff]
      %v161 = vld [vmem:[#allocation2 + $0x8] sm:$0xff]
      %v162 = vld [vmem:[#allocation2 + $0x10] sm:$0xff]
      %v163 = vld [vmem:[#allocation2 + $0x18] sm:$0xff]
      %v164 = vld [vmem:[%s2] sm:$0x3]
      %v166 = vlaneseq
      %v167 = vshrl.u32 %v166, 7
      %v168 = vsub.s32 0, %v167
      %v169 = vrot.slane %v164, %v168
      %v170 = vlaneseq
      %v171 = vshrl.u32 %v170, 7
      %v172 = vsub.s32 1, %v171
      %v173 = vrot.slane %v164, %v172
      %v176 = vadd.f32 %v160, %v169
      %v177 = vadd.f32 %v161, %v173
      %v178 = vadd.f32 %v162, %v169
      %v179 = vadd.f32 %v163, %v173
      %v180 = vmax.f32 %v176, %v177
      %181 = vmax.xlane.f32.xlu0 %v180
      %v182 = vpop.xlane.xlu0 %181
      %v183 = vmax.f32 %v178, %v179
      %184 = vmax.xlane.f32.xlu0 %v183
      %v185 = vpop.xlane.xlu0 %184
      %v186 = vsub.f32 %v176, %v182
      %v187 = vsub.f32 %v177, %v182
      %v188 = vsub.f32 %v178, %v185
      %v189 = vsub.f32 %v179, %v185
      %v190 = vmul.f32 %v186, 1.442695
      %v191 = vpow.pop %v190
      %v192 = vmul.f32 %v187, 1.442695
      %v193 = vpow.pop %v192
      %v194 = vmul.f32 %v188, 1.442695
      %v195 = vpow.pop %v194
      %v196 = vmul.f32 %v189, 1.442695
      %v197 = vpow.pop %v196
      %v198 = vadd.f32 %v191, %v193
      %199 = vadd.xlane.f32.xlu0 %v198
      %v200 = vpop.xlane.xlu0 %199
      %v201 = vadd.f32 %v195, %v197
      %202 = vadd.xlane.f32.xlu0 %v201
      %v203 = vpop.xlane.xlu0 %202
      %v204 = vlog2.pop %v200
      %v205 = vmul.f32 %v204, 0.6931472
      %v206 = vlog2.pop %v203
      %v207 = vmul.f32 %v206, 0.6931472
      %v208 = vsub.f32 %v186, %v205
      %v209 = vsub.f32 %v187, %v205
      %v210 = vsub.f32 %v188, %v207
      %v211 = vsub.f32 %v189, %v207
      %212 = vst [vmem:[#allocation8] sm:$0xff] %v208
      %213 = vst [vmem:[#allocation8 + $0x8] sm:$0xff] %v209
      %214 = vst [vmem:[#allocation8 + $0x10] sm:$0xff] %v210
      %215 = vst [vmem:[#allocation8 + $0x18] sm:$0xff] %v211
    $region29: #{tpu_custom_call.1} parent=1 // pred_fallthru
      _
    // Predicated region
    $region30: #{tpu_custom_call.1} parent=1 // pred_check
      _
    $region31: #{tpu_custom_call.1} parent=1 // pred_check_branch
      %217 = sbr.rel (0) target = $region33
    $region32: #{tpu_custom_call.1} parent=1 // pred_region
      %s219 = ssub.s32 512, 512
      %220 = vsyncadd [#allocation5], %s219
      %s221 = sshll.u32 [#allocation8], 4
      %s222 = int_to_ptr.vmem [resolvable:$true] %s221
      %227 = dma.vmem_to_hbm [thread:$0]  %s222, 512, %s3, [#allocation5], 256, 256, 16
    $region33: #{tpu_custom_call.1} parent=1 // pred_fallthru
      _
    // Predicated region
    $region34: #{tpu_custom_call.1} parent=1 // pred_check
      _
    $region35: #{tpu_custom_call.1} parent=1 // pred_check_branch
      %229 = sbr.rel (0) target = $region37
    $region36: #{tpu_custom_call.1} parent=1 // pred_region
      %230 = dma.done [#allocation5], 512
    $region37: #{tpu_custom_call.1} parent=1 // pred_fallthru
      _
    %231 = vsyncpa [#allocation4], 1
    %232 = vsyncpa [#allocation7], 1
    %233 = vsyncpa [#allocation5], 1

</llo_original>
